<compile_context>
chip_gen: v6e
topology: v6e:2x2x1
jax: 0.10.0
libtpu: 0.0.40
codegen_flags: <defaults>
</compile_context>

<pallas_src>
import functools

import numpy as np
import jax
import jax.numpy as jnp
from jax.experimental import pallas as pl
from jax.experimental.pallas import tpu as pltpu

# Module-level constants referenced (but not defined) by the PyTorch snippet.
TOPK_SPAN = 4
MAX_SPAN_LENGTH = 6
MAX_CANDIDATE_SPANS_PER_SAMPLE_FOR_KL_LOSS = 12

_C_PAD = 128          # candidate lanes (lane-dense last dim)
_NEG_FILL = -1.0e30   # score fill for invalid lanes / padded rows


# --------------------------------------------------------------------------
# Pallas kernel
# --------------------------------------------------------------------------
def _span_kl_kernel(s_ref, t_ref, out_ref):
    """Accumulates (loss_sum, valid_row_count) into out_ref lanes (.,0)/(.,1)."""
    step = pl.program_id(0)

    @pl.when(step == 0)
    def _():
        out_ref[...] = jnp.zeros_like(out_ref)

    s = s_ref[...]                      # (TG, 128) f32, invalid lanes = -1e30
    t = t_ref[...]                      # (TG, 128) f32, normalized target (0 on pad)
    tg, c = s.shape

    ones_c = jnp.ones((c, c), jnp.float32)      # MXU row-sum helper

    # ---- masked log-softmax over candidate lanes (mask pre-applied on host) ----
    m = jnp.max(s, axis=-1, keepdims=True)      # XLU (only cross-lane op left there)
    sm = s - m
    ex = jnp.exp(sm)                            # EUP; masked lanes underflow to 0
    denom = jnp.dot(ex, ones_c, preferred_element_type=jnp.float32)   # MXU row-sum, replicated
    logp = sm - jnp.log(denom)                  # (TG, 128)

    # ---- per-element KL: t * (log t - logp); t==0 lanes contribute exactly 0 ----
    log_t = jnp.log(jnp.where(t > 0.0, t, 1.0))
    kl_elem = t * (log_t - logp)

    # ---- per-row sums via MXU (replicated across lanes) ----
    kl_row = jnp.dot(kl_elem, ones_c, preferred_element_type=jnp.float32)
    t_row = jnp.dot(t, ones_c, preferred_element_type=jnp.float32)

    # row validity: real row (target sums to ~1) and finite KL (torch nan/inf filter)
    finite = (kl_row == kl_row) & (jnp.abs(kl_row) < 3.0e38)
    ok = finite & (t_row > 0.5)

    # pack per-row (masked kl, ok) into lanes 0/1 and reduce over rows on the MXU
    lane = jax.lax.broadcasted_iota(jnp.int32, (tg, c), 1)
    sel = jnp.where(lane == 0, jnp.where(ok, kl_row, 0.0),
                    jnp.where(lane == 1, ok.astype(jnp.float32), 0.0))
    ones_r = jnp.ones((8, tg), jnp.float32)
    contrib = jnp.dot(ones_r, sel, preferred_element_type=jnp.float32)  # (8, 128)

    out_ref[...] += contrib


# --------------------------------------------------------------------------
# Cached, jitted pallas_call per (bucketed) row count + reduction
# --------------------------------------------------------------------------
@functools.lru_cache(maxsize=None)
def _get_span_kl_fn(g_pad: int, reduction: str):
    tg = min(g_pad, 512)                 # common buckets -> single grid step
    num_tiles = g_pad // tg

    call = pl.pallas_call(
        _span_kl_kernel,
        out_shape=jax.ShapeDtypeStruct((8, 128), jnp.float32),
        grid=(num_tiles,),
        in_specs=[pl.BlockSpec((tg, _C_PAD), lambda i: (i, 0)),
                  pl.BlockSpec((tg, _C_PAD), lambda i: (i, 0))],
        out_specs=pl.BlockSpec((8, 128), lambda i: (0, 0)),   # resident accumulator
        compiler_params=pltpu.CompilerParams(
            dimension_semantics=("arbitrary",)),
    )

    def fn(scores, target):
        part = call(scores, target)      # (8, 128): [.,0]=loss sum, [.,1]=count
        loss_sum = part[0, 0]
        cnt = part[0, 1]
        if reduction == 'mean':
            return jnp.where(cnt > 0.0, loss_sum / jnp.maximum(cnt, 1.0), 0.0)
        return loss_sum                   # 'sum'

    return jax.jit(fn)


def _bucket_rows(g: int) -> int:
    for b in (8, 64, 512):
        if g <= b:
            return b
    return ((g + 511) // 512) * 512


# --------------------------------------------------------------------------
# Host-side glue: candidate-span selection (mirrors the PyTorch control flow)
# --------------------------------------------------------------------------
def _build_rows(start_np, end_np, quads_labels_batch, span_type):
    B, L = start_np.shape
    rows = []
    for b in range(B):
        sl, el = start_np[b], end_np[b]
        quads = quads_labels_batch[b]
        gold = []
        for quad in quads:
            if span_type == 'target':
                s, e = int(quad['t_start_token']), int(quad['t_end_token'])
            elif span_type == 'argument':
                s, e = int(quad['a_start_token']), int(quad['a_end_token'])
            else:
                s, e = -1, -1
            if 0 <= s <= e < L:
                gold.append((s, e))
        if not gold:
            continue
        v0, v1 = 1, L - 2
        if v1 < v0:
            continue
        k = min(TOPK_SPAN, v1 - v0 + 1)
        if k <= 0:
            continue
        top_s = (np.argsort(-sl[v0:v1 + 1], kind='stable')[:k] + v0).tolist()
        top_e = (np.argsort(-el[v0:v1 + 1], kind='stable')[:k] + v0).tolist()
        raw = []
        for si in top_s:
            for ei in top_e:
                if si <= ei and ei - si + 1 <= MAX_SPAN_LENGTH:
                    raw.append(((si, ei), float(sl[si] + el[ei])))
        if not raw:
            continue
        raw.sort(key=lambda x: x[1], reverse=True)

        cand, cscores, added = [], [], set()
        for gs, ge in gold:
            if (gs, ge) not in added:
                cand.append((gs, ge))
                cscores.append(float(sl[gs] + el[ge]))
                added.add((gs, ge))
        n_add = MAX_CANDIDATE_SPANS_PER_SAMPLE_FOR_KL_LOSS - len(cand)
        if n_add > 0:
            for (s, e), sc in raw:
                if (s, e) not in added:
                    cand.append((s, e))
                    cscores.append(sc)
                    added.add((s, e))
                    n_add -= 1
                    if n_add == 0:
                        break
        if not cand:
            continue
        for gs, ge in gold:
            rows.append(dict(cand=cand, scores=cscores, gs=gs, ge=ge,
                             gidx=cand.index((gs, ge))))
    return rows


class SpanBoundarySmoothKLDivLossPallas:
    def __init__(self, epsilon=0.1, D_smooth=1, reduction='mean', span_type='target'):
        if reduction not in ('mean', 'sum'):
            raise ValueError(f'Unsupported reduction type: {reduction}')
        self.epsilon = float(epsilon)
        self.D_smooth = int(D_smooth)
        self.reduction = reduction
        self.span_type = span_type

    def __call__(self, start_logits, end_logits, quads_labels_batch):
        start_np = np.asarray(start_logits, dtype=np.float32)
        end_np = np.asarray(end_logits, dtype=np.float32)
        rows = _build_rows(start_np, end_np, quads_labels_batch, self.span_type)
        if not rows:
            return jnp.float32(0.0)

        G = len(rows)
        G_pad = _bucket_rows(G)          # fixed buckets -> no per-call recompile
        C = _C_PAD

        scores = np.full((G_pad, C), _NEG_FILL, np.float32)
        target = np.zeros((G_pad, C), np.float32)
        for r, row in enumerate(rows):
            n = len(row['cand'])
            assert n <= C, "candidate table overflow"
            scores[r, :n] = row['scores']
            gs, ge, gidx = row['gs'], row['ge'], row['gidx']
            tgt = np.zeros(n, np.float32)
            nbs = [i for i, (a, b_) in enumerate(row['cand'])
                   if i != gidx and abs(gs - a) + abs(ge - b_) <= self.D_smooth]
            if not nbs:
                tgt[gidx] = 1.0
            else:
                tgt[gidx] = 1.0 - self.epsilon
                for i in nbs:
                    tgt[i] = self.epsilon / len(nbs)
            ts = float(tgt.sum())
            if ts <= 1e-6:               # torch 'continue' branch; row stays padded
                continue
            target[r, :n] = tgt / ts

        fn = _get_span_kl_fn(G_pad, self.reduction)
        return fn(jnp.asarray(scores), jnp.asarray(target))


# --------------------------------------------------------------------------
# Pure-numpy reference (mirrors the PyTorch forward) for a correctness check.
# --------------------------------------------------------------------------
def _ref_loss(start_np, end_np, quads, epsilon, d_smooth, reduction, span_type):
    rows = _build_rows(start_np, end_np, quads, span_type)
    acc, n = 0.0, 0
    for row in rows:
        sc = np.asarray(row['scores'], np.float32)
        lp = sc - sc.max()
        lp = lp - np.log(np.exp(lp).sum())
        nc = len(row['cand'])
        tgt = np.zeros(nc, np.float32)
        nbs = [i for i, (a, b_) in enumerate(row['cand'])
               if i != row['gidx'] and abs(row['gs'] - a) + abs(row['ge'] - b_) <= d_smooth]
        if not nbs:
            tgt[row['gidx']] = 1.0
        else:
            tgt[row['gidx']] = 1.0 - epsilon
            for i in nbs:
                tgt[i] = epsilon / len(nbs)
        ts = tgt.sum()
        if ts <= 1e-6:
            continue
        tgt = tgt / ts
        kl = float(np.sum(np.where(tgt > 0,
                                   tgt * (np.log(np.where(tgt > 0, tgt, 1.0)) - lp), 0.0)))
        acc += kl
        n += 1
    if n == 0:
        return 0.0
    return acc / n if reduction == 'mean' else acc


if __name__ == "__main__":
    B, L = 2, 16
    key = jax.random.PRNGKey(0)
    k1, k2 = jax.random.split(key)
    start_logits = jax.random.normal(k1, (B, L), dtype=jnp.float32)
    end_logits = jax.random.normal(k2, (B, L), dtype=jnp.float32)

    # synthetic labels (plain ints stand in for the .item() of torch scalars)
    quads_labels_batch = [
        [{'t_start_token': 2, 't_end_token': 4},
         {'t_start_token': 7, 't_end_token': 7}],
        [{'t_start_token': 3, 't_end_token': 5}],
    ]

    loss_fn = SpanBoundarySmoothKLDivLossPallas(
        epsilon=0.1, D_smooth=1, reduction='mean', span_type='target')
    out = loss_fn(start_logits, end_logits, quads_labels_batch)
    out = jax.block_until_ready(out)

    ref = _ref_loss(np.asarray(start_logits), np.asarray(end_logits),
                    quads_labels_batch, 0.1, 1, 'mean', 'target')
    assert np.isfinite(float(out))
    assert abs(float(out) - ref) < 1e-4, (float(out), ref)

    # second call (different labels, same bucket) reuses the cached compiled fn
    quads2 = [[{'t_start_token': 5, 't_end_token': 6}],
              [{'t_start_token': 2, 't_end_token': 2}]]
    out2 = jax.block_until_ready(loss_fn(start_logits, end_logits, quads2))
    ref2 = _ref_loss(np.asarray(start_logits), np.asarray(end_logits),
                     quads2, 0.1, 1, 'mean', 'target')
    assert np.isfinite(float(out2))
    assert abs(float(out2) - ref2) < 1e-4, (float(out2), ref2)

    # 'sum' reduction path
    loss_fn_sum = SpanBoundarySmoothKLDivLossPallas(
        epsilon=0.1, D_smooth=1, reduction='sum', span_type='target')
    out3 = jax.block_until_ready(loss_fn_sum(start_logits, end_logits, quads_labels_batch))
    ref3 = _ref_loss(np.asarray(start_logits), np.asarray(end_logits),
                     quads_labels_batch, 0.1, 1, 'sum', 'target')
    assert abs(float(out3) - ref3) < 1e-4, (float(out3), ref3)

    print("KERNEL_OK")
</pallas_src>

<mosaic_0001>
module attributes {stable_mosaic.version = 11 : i64} {
  func.func @_span_kl_kernel(%arg0: i32, %arg1: memref<8x128xf32, #tpu.memory_space<vmem>>, %arg2: memref<8x128xf32, #tpu.memory_space<vmem>>, %arg3: memref<8x128xf32, #tpu.memory_space<vmem>>) attributes {dimension_semantics = [#tpu.dimension_semantics<arbitrary>], iteration_bounds = array<i64: 1>, scalar_prefetch = 0 : i64, scratch_operands = 0 : i64, tpu.core_type = #tpu.core_type<tc>, window_params = [{transform_indices = @transform_0, window_bounds = array<i64: 8, 128>}, {transform_indices = @transform_1, window_bounds = array<i64: 8, 128>}, {pipeline_mode = #tpu.pipeline_mode<synchronous>, transform_indices = @transform_2, window_bounds = array<i64: 8, 128>}]} {
    %c0_i32 = arith.constant 0 : i32
    %0 = arith.cmpi eq, %arg0, %c0_i32 : i32
    %1 = arith.extui %0 : i1 to i32
    %c0_i32_0 = arith.constant 0 : i32
    %2 = arith.cmpi ne, %1, %c0_i32_0 : i32
    scf.if %2 {
      %cst_21 = arith.constant 0.000000e+00 : f32
      %48 = vector.broadcast %cst_21 : f32 to vector<8x128xf32>
      %c0_22 = arith.constant 0 : index
      %c0_23 = arith.constant 0 : index
      %49 = vector.load %arg3[%c0_22, %c0_23] : memref<8x128xf32, #tpu.memory_space<vmem>>, vector<8x128xf32>
      tpu.vector_store %arg3[%c0_22, %c0_23], %48 {strides = array<i32>} : memref<8x128xf32, #tpu.memory_space<vmem>>, vector<8x128xf32>,
    } else {
    }
    %c0 = arith.constant 0 : index
    %c0_1 = arith.constant 0 : index
    %3 = vector.load %arg1[%c0, %c0_1] : memref<8x128xf32, #tpu.memory_space<vmem>>, vector<8x128xf32>
    %c0_2 = arith.constant 0 : index
    %c0_3 = arith.constant 0 : index
    %4 = vector.load %arg2[%c0_2, %c0_3] : memref<8x128xf32, #tpu.memory_space<vmem>>, vector<8x128xf32>
    %cst = arith.constant 1.000000e+00 : f32
    %5 = vector.broadcast %cst : f32 to vector<128x128xf32>
    %cst_4 = arith.constant dense<0xFF800000> : vector<8xf32>
    %6 = vector.multi_reduction <maximumf>, %3, %cst_4 [1] : vector<8x128xf32> to vector<8xf32>
    %7 = vector.shape_cast %6 : vector<8xf32> to vector<8x1xf32>
    %8 = vector.broadcast %7 : vector<8x1xf32> to vector<8x128xf32>
    %9 = arith.subf %3, %8 : vector<8x128xf32>
    %10 = math.exp %9 : vector<8x128xf32>
    %cst_5 = arith.constant dense<0.000000e+00> : vector<8x128xf32>
    %11 = tpu.matmul %10, %5, %cst_5 {dimension_numbers = #tpu.dot_dimension_numbers<[1], [0], [0], [1], [0, 0, 1, 1], [], []>} : vector<8x128xf32>, vector<128x128xf32>, vector<8x128xf32> -> vector<8x128xf32>
    %12 = math.log %11 : vector<8x128xf32>
    %13 = arith.subf %9, %12 : vector<8x128xf32>
    %cst_6 = arith.constant 0.000000e+00 : f32
    %14 = vector.broadcast %cst_6 : f32 to vector<8x128xf32>
    %15 = arith.cmpf ogt, %4, %14 : vector<8x128xf32>
    %cst_7 = arith.constant 1.000000e+00 : f32
    %16 = vector.broadcast %cst_7 : f32 to vector<8x128xf32>
    %17 = arith.select %15, %4, %16 : vector<8x128xi1>, vector<8x128xf32>
    %18 = math.log %17 : vector<8x128xf32>
    %19 = arith.subf %18, %13 : vector<8x128xf32>
    %20 = arith.mulf %4, %19 : vector<8x128xf32>
    %cst_8 = arith.constant dense<0.000000e+00> : vector<8x128xf32>
    %21 = tpu.matmul %20, %5, %cst_8 {dimension_numbers = #tpu.dot_dimension_numbers<[1], [0], [0], [1], [0, 0, 1, 1], [], []>} : vector<8x128xf32>, vector<128x128xf32>, vector<8x128xf32> -> vector<8x128xf32>
    %cst_9 = arith.constant dense<0.000000e+00> : vector<8x128xf32>
    %22 = tpu.matmul %4, %5, %cst_9 {dimension_numbers = #tpu.dot_dimension_numbers<[1], [0], [0], [1], [0, 0, 1, 1], [], []>} : vector<8x128xf32>, vector<128x128xf32>, vector<8x128xf32> -> vector<8x128xf32>
    %23 = arith.cmpf oeq, %21, %21 : vector<8x128xf32>
    %24 = math.absf %21 : vector<8x128xf32>
    %cst_10 = arith.constant 3.000000e+38 : f32
    %25 = vector.broadcast %cst_10 : f32 to vector<8x128xf32>
    %26 = arith.cmpf olt, %24, %25 : vector<8x128xf32>
    %27 = arith.andi %23, %26 : vector<8x128xi1>
    %cst_11 = arith.constant 5.000000e-01 : f32
    %28 = vector.broadcast %cst_11 : f32 to vector<8x128xf32>
    %29 = arith.cmpf ogt, %22, %28 : vector<8x128xf32>
    %30 = arith.andi %27, %29 : vector<8x128xi1>
    %31 = tpu.iota {dimensions = array<i32: 1>} : vector<8x128xi32>
    %c0_i32_12 = arith.constant 0 : i32
    %32 = vector.broadcast %c0_i32_12 : i32 to vector<8x128xi32>
    %33 = arith.cmpi eq, %31, %32 : vector<8x128xi32>
    %cst_13 = arith.constant 0.000000e+00 : f32
    %34 = vector.broadcast %cst_13 : f32 to vector<8x128xf32>
    %35 = arith.select %30, %21, %34 : vector<8x128xi1>, vector<8x128xf32>
    %c1_i32 = arith.constant 1 : i32
    %36 = vector.broadcast %c1_i32 : i32 to vector<8x128xi32>
    %37 = arith.cmpi eq, %31, %36 : vector<8x128xi32>
    %38 = arith.extui %30 : vector<8x128xi1> to vector<8x128xi32>
    %39 = arith.sitofp %38 : vector<8x128xi32> to vector<8x128xf32>
    %cst_14 = arith.constant 0.000000e+00 : f32
    %40 = vector.broadcast %cst_14 : f32 to vector<8x128xf32>
    %41 = arith.select %37, %39, %40 : vector<8x128xi1>, vector<8x128xf32>
    %42 = arith.select %33, %35, %41 : vector<8x128xi1>, vector<8x128xf32>
    %cst_15 = arith.constant 1.000000e+00 : f32
    %43 = vector.broadcast %cst_15 : f32 to vector<8x8xf32>
    %cst_16 = arith.constant dense<0.000000e+00> : vector<8x128xf32>
    %44 = tpu.matmul %43, %42, %cst_16 {dimension_numbers = #tpu.dot_dimension_numbers<[1], [0], [0], [1], [0, 0, 1, 1], [], []>} : vector<8x8xf32>, vector<8x128xf32>, vector<8x128xf32> -> vector<8x128xf32>
    %c0_17 = arith.constant 0 : index
    %c0_18 = arith.constant 0 : index
    %45 = vector.load %arg3[%c0_17, %c0_18] : memref<8x128xf32, #tpu.memory_space<vmem>>, vector<8x128xf32>
    %46 = arith.addf %45, %44 : vector<8x128xf32>
    %c0_19 = arith.constant 0 : index
    %c0_20 = arith.constant 0 : index
    %47 = vector.load %arg3[%c0_19, %c0_20] : memref<8x128xf32, #tpu.memory_space<vmem>>, vector<8x128xf32>
    tpu.vector_store %arg3[%c0_19, %c0_20], %46 {strides = array<i32>} : memref<8x128xf32, #tpu.memory_space<vmem>>, vector<8x128xf32>,
    return
  }
  func.func @transform_0(%arg0: i32) -> (i32, i32) {
    %c0_i32 = arith.constant 0 : i32
    %c0_i32_0 = arith.constant 0 : i32
    return %arg0, %c0_i32 : i32, i32
  }
  func.func @transform_1(%arg0: i32) -> (i32, i32) {
    %c0_i32 = arith.constant 0 : i32
    %c0_i32_0 = arith.constant 0 : i32
    return %arg0, %c0_i32 : i32, i32
  }
  func.func @transform_2(%arg0: i32) -> (i32, i32) {
    %c0_i32 = arith.constant 0 : i32
    %c0_i32_0 = arith.constant 0 : i32
    %c0_i32_1 = arith.constant 0 : i32
    return %c0_i32, %c0_i32_0 : i32, i32
  }
}

</mosaic_0001>

<llo_original>
// kernel: fn.1
$region0: #{fn.1}
  #allocation0 [shape = 'u32[]', space=smem, size = 0x4, offset = 0x4, fixed_abs, tag = 'smem constant byte address 0x4 - core index']
  #allocation1 [shape = 'u32[144,128]{1,0:T(1,128)}', space=vmem, size = 0x12000, scoped, tag = 'internal scratch']
  %s0 = inlined_call_operand.hbm [shape: f32[8,128], index: 0, kind: input, shape index: {}]
  %s1 = inlined_call_operand.hbm [shape: f32[8,128], index: 1, kind: input, shape index: {}]
  %s2 = inlined_call_operand.vmem [shape: f32[8,128], index: 2, kind: output, shape index: {}]
  %s3 = sld [smem:[#allocation0]]
  $region30: #{fn.1} parent=0
    _
  %s5 = ssub.s32 1, %s3
  %s6 = scalar_select 0, %s5, %s3
  $region1: #{fn.1} parent=0
    #allocation2 [shape = 'u8[4096]{0}', space=vmem, size = 0x1000, scoped, tag = 'input window, operand 0, single buffered']
    #allocation3 [shape = 's32[1]{0}', space=sflag, size = 0x4, scoped, tag = 'scoped memory for fn.1']
    #allocation4 [shape = 'u8[4096]{0}', space=vmem, size = 0x1000, scoped, tag = 'input window, operand 1, single buffered']
    #allocation5 [shape = 's32[1]{0}', space=sflag, size = 0x4, scoped, tag = 'scoped memory for fn.1']
    %7 = vsyncpa [#allocation3], 0
    %8 = vsyncpa [#allocation5], 0
    // Predicated region
    $region2: #{fn.1} parent=1 // pred_check
      _
    $region3: #{fn.1} parent=1 // pred_check_branch
      %10 = sbr.rel (0) target = $region5
    $region4: #{fn.1} parent=1 // pred_region
      %s12 = ssub.s32 128, 128
      %13 = vsyncadd [#allocation3], %s12
      %s15 = sshll.u32 [#allocation2], 4
      %s16 = int_to_ptr.vmem [resolvable:$true] %s15
      %18 = dma.hbm_to_vmem [thread:$0]  %s0, 128, %s16, [#allocation3]
    $region5: #{fn.1} parent=1 // pred_fallthru
      _
    // Predicated region
    $region6: #{fn.1} parent=1 // pred_check
      _
    $region7: #{fn.1} parent=1 // pred_check_branch
      %20 = sbr.rel (0) target = $region9
    $region8: #{fn.1} parent=1 // pred_region
      %s22 = ssub.s32 128, 128
      %23 = vsyncadd [#allocation5], %s22
      %s25 = sshll.u32 [#allocation4], 4
      %s26 = int_to_ptr.vmem [resolvable:$true] %s25
      %28 = dma.hbm_to_vmem [thread:$0]  %s1, 128, %s26, [#allocation5]
    $region9: #{fn.1} parent=1 // pred_fallthru
      _
    // Predicated region
    $region10: #{fn.1} parent=1 // pred_check
      _
    $region11: #{fn.1} parent=1 // pred_check_branch
      %30 = sbr.rel (0) target = $region13
    $region12: #{fn.1} parent=1 // pred_region
      %31 = dma.done [#allocation3], 128
    $region13: #{fn.1} parent=1 // pred_fallthru
      _
    // Predicated region
    $region14: #{fn.1} parent=1 // pred_check
      _
    $region15: #{fn.1} parent=1 // pred_check_branch
      %33 = sbr.rel (0) target = $region17
    $region16: #{fn.1} parent=1 // pred_region
      %34 = dma.done [#allocation5], 128
    $region17: #{fn.1} parent=1 // pred_fallthru
      _
    %p35 = scmp.eq.s32.totalorder 0, 0
    // Predicated region
    $region18: #{fn.1} parent=1 // pred_check
      %p36 = pneg %p35
    $region19: #{fn.1} parent=1 // pred_check_branch
      %38 = sbr.rel (%p36) target = $region21
    $region20: #{fn.1} parent=1 // pred_region
      %39 = vst [vmem:[%s2] sm:$0xff] 0.0
    $region21: #{fn.1} parent=1 // pred_fallthru
      _
    %v40 = vld [vmem:[#allocation2] sm:$0xff]
    %v41 = vld [vmem:[#allocation4] sm:$0xff]
    %42 = vmax.xlane.f32.xlu0 %v40
    %v43 = vpop.xlane.xlu0 %42
    %v44 = vsub.f32 %v40, %v43
    %v45 = vmul.f32 %v44, 1.442695
    %v46 = vpow.pop %v45
    %47 = vmatprep.subr.mxu0 0.0
    %48 = vmatpush1.msra.mxu0 1.0
    %49 = vmatprep.subr.mxu0 0.0
    %50 = vmatpush1.msra.mxu0 1.0
    %51 = vmatprep.subr.mxu0 0.0
    %52 = vmatpush1.msra.mxu0 1.0
    %53 = vmatprep.subr.mxu0 0.0
    %54 = vmatpush1.msra.mxu0 1.0
    %55 = vmatprep.subr.mxu0 0.0
    %56 = vmatpush1.msra.mxu0 1.0
    %57 = vmatprep.subr.mxu0 0.0
    %58 = vmatpush1.msra.mxu0 1.0
    %59 = vmatprep.subr.mxu0 0.0
    %60 = vmatpush1.msra.mxu0 1.0
    %61 = vmatprep.subr.mxu0 0.0
    %62 = vmatpush1.msra.mxu0 1.0
    %63 = vmatprep.subr.mxu0 0.0
    %64 = vmatpush1.msra.mxu0 1.0
    %65 = vmatprep.subr.mxu0 0.0
    %66 = vmatpush1.msra.mxu0 1.0
    %67 = vmatprep.subr.mxu0 0.0
    %68 = vmatpush1.msra.mxu0 1.0
    %69 = vmatprep.subr.mxu0 0.0
    %70 = vmatpush1.msra.mxu0 1.0
    %71 = vmatprep.subr.mxu0 0.0
    %72 = vmatpush1.msra.mxu0 1.0
    %73 = vmatprep.subr.mxu0 0.0
    %74 = vmatpush1.msra.mxu0 1.0
    %75 = vmatprep.subr.mxu0 0.0
    %76 = vmatpush1.msra.mxu0 1.0
    %77 = vmatprep.subr.mxu0 0.0
    %78 = vmatpush1.msra.mxu0 1.0
    %79 = vmatprep.subr.mxu0 0.0
    %80 = vmatpush2.msra.mxu0 0.0
    %81 = vmatprep.subr.mxu0 0.0
    %82 = vmatpush2.msra.mxu0 0.0
    %83 = vmatprep.subr.mxu0 0.0
    %84 = vmatpush2.msra.mxu0 0.0
    %85 = vmatprep.subr.mxu0 0.0
    %86 = vmatpush2.msra.mxu0 0.0
    %87 = vmatprep.subr.mxu0 0.0
    %88 = vmatpush2.msra.mxu0 0.0
    %89 = vmatprep.subr.mxu0 0.0
    %90 = vmatpush2.msra.mxu0 0.0
    %91 = vmatprep.subr.mxu0 0.0
    %92 = vmatpush2.msra.mxu0 0.0
    %93 = vmatprep.subr.mxu0 0.0
    %94 = vmatpush2.msra.mxu0 0.0
    %95 = vmatprep.subr.mxu0 0.0
    %96 = vmatpush2.msra.mxu0 0.0
    %97 = vmatprep.subr.mxu0 0.0
    %98 = vmatpush2.msra.mxu0 0.0
    %99 = vmatprep.subr.mxu0 0.0
    %100 = vmatpush2.msra.mxu0 0.0
    %101 = vmatprep.subr.mxu0 0.0
    %102 = vmatpush2.msra.mxu0 0.0
    %103 = vmatprep.subr.mxu0 0.0
    %104 = vmatpush2.msra.mxu0 0.0
    %105 = vmatprep.subr.mxu0 0.0
    %106 = vmatpush2.msra.mxu0 0.0
    %107 = vmatprep.subr.mxu0 0.0
    %108 = vmatpush2.msra.mxu0 0.0
    %109 = vmatprep.subr.mxu0 0.0
    %110 = vmatpush2.msra.mxu0 0.0
    %111 = vmatprep.mubr.f32.mxu0 0.0
    %112 = vmatmul.mubr.f32.gmra.mxu0 %v46
    %v113 = vpop.f32.mrf.mxu0
    %v114 = vadd.f32 0.0, %v113
    %v115 = vpop.f32.mrf.mxu0
    %116 = vdwg.mxu0
    %v117 = vlog2.pop %v114
    %v118 = vmul.f32 %v117, 0.6931472
    %v119 = vsub.f32 %v44, %v118
    %vm120 = vcmp.gt.f32.partialorder %v41, 0.0
    %v121 = vsel %vm120, %v41, 1.0
    %v122 = vlog2.pop %v121
    %v123 = vmul.f32 %v122, 0.6931472
    %v124 = vsub.f32 %v123, %v119
    %v125 = vmul.f32 %v41, %v124
    %126 = vmatprep.subr.mxu0 0.0
    %127 = vmatpush1.msra.mxu0 1.0
    %128 = vmatprep.subr.mxu0 0.0
    %129 = vmatpush1.msra.mxu0 1.0
    %130 = vmatprep.subr.mxu0 0.0
    %131 = vmatpush1.msra.mxu0 1.0
    %132 = vmatprep.subr.mxu0 0.0
    %133 = vmatpush1.msra.mxu0 1.0
    %134 = vmatprep.subr.mxu0 0.0
    %135 = vmatpush1.msra.mxu0 1.0
    %136 = vmatprep.subr.mxu0 0.0
    %137 = vmatpush1.msra.mxu0 1.0
    %138 = vmatprep.subr.mxu0 0.0
    %139 = vmatpush1.msra.mxu0 1.0
    %140 = vmatprep.subr.mxu0 0.0
    %141 = vmatpush1.msra.mxu0 1.0
    %142 = vmatprep.subr.mxu0 0.0
    %143 = vmatpush1.msra.mxu0 1.0
    %144 = vmatprep.subr.mxu0 0.0
    %145 = vmatpush1.msra.mxu0 1.0
    %146 = vmatprep.subr.mxu0 0.0
    %147 = vmatpush1.msra.mxu0 1.0
    %148 = vmatprep.subr.mxu0 0.0
    %149 = vmatpush1.msra.mxu0 1.0
    %150 = vmatprep.subr.mxu0 0.0
    %151 = vmatpush1.msra.mxu0 1.0
    %152 = vmatprep.subr.mxu0 0.0
    %153 = vmatpush1.msra.mxu0 1.0
    %154 = vmatprep.subr.mxu0 0.0
    %155 = vmatpush1.msra.mxu0 1.0
    %156 = vmatprep.subr.mxu0 0.0
    %157 = vmatpush1.msra.mxu0 1.0
    %158 = vmatprep.subr.mxu0 0.0
    %159 = vmatpush2.msra.mxu0 0.0
    %160 = vmatprep.subr.mxu0 0.0
    %161 = vmatpush2.msra.mxu0 0.0
    %162 = vmatprep.subr.mxu0 0.0
    %163 = vmatpush2.msra.mxu0 0.0
    %164 = vmatprep.subr.mxu0 0.0
    %165 = vmatpush2.msra.mxu0 0.0
    %166 = vmatprep.subr.mxu0 0.0
    %167 = vmatpush2.msra.mxu0 0.0
    %168 = vmatprep.subr.mxu0 0.0
    %169 = vmatpush2.msra.mxu0 0.0
    %170 = vmatprep.subr.mxu0 0.0
    %171 = vmatpush2.msra.mxu0 0.0
    %172 = vmatprep.subr.mxu0 0.0
    %173 = vmatpush2.msra.mxu0 0.0
    %174 = vmatprep.subr.mxu0 0.0
    %175 = vmatpush2.msra.mxu0 0.0
    %176 = vmatprep.subr.mxu0 0.0
    %177 = vmatpush2.msra.mxu0 0.0
    %178 = vmatprep.subr.mxu0 0.0
    %179 = vmatpush2.msra.mxu0 0.0
    %180 = vmatprep.subr.mxu0 0.0
    %181 = vmatpush2.msra.mxu0 0.0
    %182 = vmatprep.subr.mxu0 0.0
    %183 = vmatpush2.msra.mxu0 0.0
    %184 = vmatprep.subr.mxu0 0.0
    %185 = vmatpush2.msra.mxu0 0.0
    %186 = vmatprep.subr.mxu0 0.0
    %187 = vmatpush2.msra.mxu0 0.0
    %188 = vmatprep.subr.mxu0 0.0
    %189 = vmatpush2.msra.mxu0 0.0
    %190 = vmatprep.mubr.f32.mxu0 0.0
    %191 = vmatmul.mubr.f32.gmra.mxu0 %v125
    %v192 = vpop.f32.mrf.mxu0
    %v193 = vadd.f32 0.0, %v192
    %v194 = vpop.f32.mrf.mxu0
    %195 = vdwg.mxu0
    %196 = vmatprep.subr.mxu0 0.0
    %197 = vmatpush1.msra.mxu0 1.0
    %198 = vmatprep.subr.mxu0 0.0
    %199 = vmatpush1.msra.mxu0 1.0
    %200 = vmatprep.subr.mxu0 0.0
    %201 = vmatpush1.msra.mxu0 1.0
    %202 = vmatprep.subr.mxu0 0.0
    %203 = vmatpush1.msra.mxu0 1.0
    %204 = vmatprep.subr.mxu0 0.0
    %205 = vmatpush1.msra.mxu0 1.0
    %206 = vmatprep.subr.mxu0 0.0
    %207 = vmatpush1.msra.mxu0 1.0
    %208 = vmatprep.subr.mxu0 0.0
    %209 = vmatpush1.msra.mxu0 1.0
    %210 = vmatprep.subr.mxu0 0.0
    %211 = vmatpush1.msra.mxu0 1.0
    %212 = vmatprep.subr.mxu0 0.0
    %213 = vmatpush1.msra.mxu0 1.0
    %214 = vmatprep.subr.mxu0 0.0
    %215 = vmatpush1.msra.mxu0 1.0
    %216 = vmatprep.subr.mxu0 0.0
    %217 = vmatpush1.msra.mxu0 1.0
    %218 = vmatprep.subr.mxu0 0.0
    %219 = vmatpush1.msra.mxu0 1.0
    %220 = vmatprep.subr.mxu0 0.0
    %221 = vmatpush1.msra.mxu0 1.0
    %222 = vmatprep.subr.mxu0 0.0
    %223 = vmatpush1.msra.mxu0 1.0
    %224 = vmatprep.subr.mxu0 0.0
    %225 = vmatpush1.msra.mxu0 1.0
    %226 = vmatprep.subr.mxu0 0.0
    %227 = vmatpush1.msra.mxu0 1.0
    %228 = vmatprep.subr.mxu0 0.0
    %229 = vmatpush2.msra.mxu0 0.0
    %230 = vmatprep.subr.mxu0 0.0
    %231 = vmatpush2.msra.mxu0 0.0
    %232 = vmatprep.subr.mxu0 0.0
    %233 = vmatpush2.msra.mxu0 0.0
    %234 = vmatprep.subr.mxu0 0.0
    %235 = vmatpush2.msra.mxu0 0.0
    %236 = vmatprep.subr.mxu0 0.0
    %237 = vmatpush2.msra.mxu0 0.0
    %238 = vmatprep.subr.mxu0 0.0
    %239 = vmatpush2.msra.mxu0 0.0
    %240 = vmatprep.subr.mxu0 0.0
    %241 = vmatpush2.msra.mxu0 0.0
    %242 = vmatprep.subr.mxu0 0.0
    %243 = vmatpush2.msra.mxu0 0.0
    %244 = vmatprep.subr.mxu0 0.0
    %245 = vmatpush2.msra.mxu0 0.0
    %246 = vmatprep.subr.mxu0 0.0
    %247 = vmatpush2.msra.mxu0 0.0
    %248 = vmatprep.subr.mxu0 0.0
    %249 = vmatpush2.msra.mxu0 0.0
    %250 = vmatprep.subr.mxu0 0.0
    %251 = vmatpush2.msra.mxu0 0.0
    %252 = vmatprep.subr.mxu0 0.0
    %253 = vmatpush2.msra.mxu0 0.0
    %254 = vmatprep.subr.mxu0 0.0
    %255 = vmatpush2.msra.mxu0 0.0
    %256 = vmatprep.subr.mxu0 0.0
    %257 = vmatpush2.msra.mxu0 0.0
    %258 = vmatprep.subr.mxu0 0.0
    %259 = vmatpush2.msra.mxu0 0.0
    %260 = vmatprep.mubr.f32.mxu0 0.0
    %261 = vmatmul.mubr.f32.gmra.mxu0 %v41
    %v262 = vpop.f32.mrf.mxu0
    %v263 = vadd.f32 0.0, %v262
    %v264 = vpop.f32.mrf.mxu0
    %265 = vdwg.mxu0
    %vm266 = vcmp.eq.f32.partialorder %v193, %v193
    %v267 = vand.u32 2147483647, %v193
    %vm268 = vcmp.lt.f32.partialorder %v267, 3e+38
    %vm269 = vmand %vm266, %vm268
    %vm270 = vcmp.gt.f32.partialorder %v263, 0.5
    %vm271 = vmand %vm269, %vm270
    %v272 = vlaneseq
    %v273 = vand.u32 %v272, 127
    %vm274 = vcmp.eq.s32.totalorder %v273, 0
    %v275 = vsel %vm271, %v193, 0.0
    %vm276 = vcmp.eq.s32.totalorder %v273, 1
    %v277 = vsel %vm271, 1, 0
    %v278 = vcvt.s32.f32 %v277
    %v279 = vsel %vm276, %v278, 0.0
    %v280 = vsel %vm274, %v275, %v279
    %vm281 = vcmask 64512
    %v283 = vsel %vm281, 1.0, 0
    %285 = vmatprep.subr.mxu0 0.0
    %286 = vmatpush1.msra.mxu0 0.0
    %287 = vmatprep.subr.mxu0 0.0
    %288 = vmatpush1.msra.mxu0 0.0
    %289 = vmatprep.subr.mxu0 0.0
    %290 = vmatpush1.msra.mxu0 0.0
    %291 = vmatprep.subr.mxu0 0.0
    %292 = vmatpush1.msra.mxu0 0.0
    %293 = vmatprep.subr.mxu0 0.0
    %294 = vmatpush1.msra.mxu0 0.0
    %295 = vmatprep.subr.mxu0 0.0
    %296 = vmatpush1.msra.mxu0 0.0
    %297 = vmatprep.subr.mxu0 0.0
    %298 = vmatpush1.msra.mxu0 0.0
    %299 = vmatprep.subr.mxu0 0.0
    %300 = vmatpush1.msra.mxu0 0.0
    %301 = vmatprep.subr.mxu0 0.0
    %302 = vmatpush1.msra.mxu0 0.0
    %303 = vmatprep.subr.mxu0 0.0
    %304 = vmatpush1.msra.mxu0 0.0
    %305 = vmatprep.subr.mxu0 0.0
    %306 = vmatpush1.msra.mxu0 0.0
    %307 = vmatprep.subr.mxu0 0.0
    %308 = vmatpush1.msra.mxu0 0.0
    %309 = vmatprep.subr.mxu0 0.0
    %310 = vmatpush1.msra.mxu0 0.0
    %311 = vmatprep.subr.mxu0 0.0
    %312 = vmatpush1.msra.mxu0 0.0
    %313 = vmatprep.subr.mxu0 0.0
    %314 = vmatpush1.msra.mxu0 0.0
    %315 = vmatprep.subr.mxu0 0.0
    %316 = vmatpush1.msra.mxu0 %v280
    %317 = vmatprep.subr.mxu0 0.0
    %318 = vmatpush2.msra.mxu0 0.0
    %319 = vmatprep.subr.mxu0 0.0
    %320 = vmatpush2.msra.mxu0 0.0
    %321 = vmatprep.subr.mxu0 0.0
    %322 = vmatpush2.msra.mxu0 0.0
    %323 = vmatprep.subr.mxu0 0.0
    %324 = vmatpush2.msra.mxu0 0.0
    %325 = vmatprep.subr.mxu0 0.0
    %326 = vmatpush2.msra.mxu0 0.0
    %327 = vmatprep.subr.mxu0 0.0
    %328 = vmatpush2.msra.mxu0 0.0
    %329 = vmatprep.subr.mxu0 0.0
    %330 = vmatpush2.msra.mxu0 0.0
    %331 = vmatprep.subr.mxu0 0.0
    %332 = vmatpush2.msra.mxu0 0.0
    %333 = vmatprep.subr.mxu0 0.0
    %334 = vmatpush2.msra.mxu0 0.0
    %335 = vmatprep.subr.mxu0 0.0
    %336 = vmatpush2.msra.mxu0 0.0
    %337 = vmatprep.subr.mxu0 0.0
    %338 = vmatpush2.msra.mxu0 0.0
    %339 = vmatprep.subr.mxu0 0.0
    %340 = vmatpush2.msra.mxu0 0.0
    %341 = vmatprep.subr.mxu0 0.0
    %342 = vmatpush2.msra.mxu0 0.0
    %343 = vmatprep.subr.mxu0 0.0
    %344 = vmatpush2.msra.mxu0 0.0
    %345 = vmatprep.subr.mxu0 0.0
    %346 = vmatpush2.msra.mxu0 0.0
    %347 = vmatprep.subr.mxu0 0.0
    %348 = vmatpush2.msra.mxu0 0.0
    %349 = vmatprep.mubr.f32.mxu0 0.0
    %350 = vmatmul.mubr.f32.gmra.mxu0 %v283
    %v351 = vpop.f32.mrf.mxu0
    %v352 = vadd.f32 0.0, %v351
    %v353 = vpop.f32.mrf.mxu0
    %354 = vdwg.mxu0
    %v355 = vld [vmem:[%s2] sm:$0xff]
    %v356 = vadd.f32 %v355, %v352
    %357 = vst [vmem:[%s2] sm:$0xff] %v356
    // Predicated region
    $region22: #{fn.1} parent=1 // pred_check
      _
    $region23: #{fn.1} parent=1 // pred_check_branch
      %359 = sbr.rel (0) target = $region25
    $region24: #{fn.1} parent=1 // pred_region
      _
    $region25: #{fn.1} parent=1 // pred_fallthru
      _
    // Predicated region
    $region26: #{fn.1} parent=1 // pred_check
      _
    $region27: #{fn.1} parent=1 // pred_check_branch
      %361 = sbr.rel (0) target = $region29
    $region28: #{fn.1} parent=1 // pred_region
      _
    $region29: #{fn.1} parent=1 // pred_fallthru
      _
    %362 = vsyncpa [#allocation3], 1
    %363 = vsyncpa [#allocation5], 1

</llo_original>
